<compile_context>
chip_gen: v6e
topology: v6e:2x2x1
jax: 0.10.0
libtpu: 0.0.40
codegen_flags: <defaults>
</compile_context>

<pallas_src>
import numpy as np
import jax
import jax.numpy as jnp
from jax.experimental import pallas as pl
from jax.experimental.pallas import tpu as pltpu

NB_INPUTS = 32       # nb_inputs
NB_EXPERTS = 4       # nb_experts
GAIT_HIDDEN = 16     # gait_layers=[16]
EXPERT_HIDDEN = 16   # expert_layers=[16]
FUSED = GAIT_HIDDEN + NB_EXPERTS * EXPERT_HIDDEN   # 80 fused output columns
BATCH = 2
BLOCK_B = 512        # batch tile for large batches (>=512 rows ~85% of HBM roofline)

# ---- packed parameter buffer layouts (all static offsets) ----
# "A" buffer: (A_ROWS, FUSED) f32
ROW_WCAT = 0                        # rows [0,32)  : fused first-layer weights (Din, 80)
ROW_BCAT = NB_INPUTS                # row 32       : fused first-layer bias    (1, 80)
ROW_GB2 = NB_INPUTS + 1             # row 33       : gating 2nd-layer bias     (1, 4) in cols [0,4)
ROW_E80 = NB_INPUTS + 2             # rows [34,38) : probs -> lane expansion   (4, 80)
A_ROWS = ROW_E80 + NB_EXPERTS       # 38
# "B" buffer: (FUSED, B_COLS) f32
COL_R = 0                           # cols [0,16)  : mixture reduction matrix  (80, 16)
COL_G2 = EXPERT_HIDDEN              # cols [16,20) : gating 2nd-layer weights  (80, 4), zero rows >=16
B_COLS = EXPERT_HIDDEN + NB_EXPERTS  # 20


def moe_kernel(x_ref, a_ref, b_ref, out_ref):
    x = x_ref[...]                                                 # (Bt, 32) f32

    # Static slices of the two packed parameter buffers (free views).
    wcat = a_ref[ROW_WCAT:ROW_WCAT + NB_INPUTS, :]                 # (32, 80)
    bcat = a_ref[ROW_BCAT:ROW_BCAT + 1, :]                         # (1, 80)
    gb2 = a_ref[ROW_GB2:ROW_GB2 + 1, 0:NB_EXPERTS]                 # (1, 4)
    e80 = a_ref[ROW_E80:ROW_E80 + NB_EXPERTS, :]                   # (4, 80)
    rmat = b_ref[:, COL_R:COL_R + EXPERT_HIDDEN]                   # (80, 16)
    g2 = b_ref[:, COL_G2:COL_G2 + NB_EXPERTS]                      # (80, 4)

    # One fused matmul for gating-hidden + all experts, one bias add, one ReLU.
    y = jnp.dot(x, wcat, preferred_element_type=jnp.float32) + bcat    # (Bt, 80)
    y = jnp.maximum(y, 0.0)

    # Gating second layer (g2 has zero rows for the expert columns of y) + softmax.
    logits = jnp.dot(y, g2, preferred_element_type=jnp.float32) + gb2  # (Bt, 4)
    m = jnp.max(logits, axis=-1, keepdims=True)
    z = jnp.exp(logits - m)
    probs = z * pl.reciprocal(jnp.sum(z, axis=-1, keepdims=True), approx=True)  # (Bt, 4)

    # Weighted mixture without per-expert slicing/broadcasting:
    #   pw[b, 16+e*16+o] = probs[b, e]  (and 0 for the gating columns),
    #   out[b, o] = sum_k (y*pw)[b, k] * R[k, o] = sum_e probs[b,e] * expert_e(x)[b,o]
    pw = jnp.dot(probs, e80, preferred_element_type=jnp.float32)       # (Bt, 80)
    out_ref[...] = jnp.dot(y * pw, rmat,
                           preferred_element_type=jnp.float32).astype(out_ref.dtype)


def pack_params(params):
    """Pack all weights/biases + constant mixing matrices into two VMEM buffers."""
    gw1, gb1, gw2, gb2, ew1, eb1 = params
    f32 = jnp.float32

    # Fused first layer: [gating_hidden | expert0 | expert1 | expert2 | expert3]
    wcat = jnp.concatenate(
        [gw1, jnp.transpose(ew1, (1, 0, 2)).reshape(NB_INPUTS, NB_EXPERTS * EXPERT_HIDDEN)],
        axis=1).astype(f32)                                            # (32, 80)
    bcat = jnp.concatenate(
        [gb1, eb1.reshape(1, NB_EXPERTS * EXPERT_HIDDEN)], axis=1).astype(f32)  # (1, 80)
    gb2_pad = jnp.concatenate(
        [gb2, jnp.zeros((1, FUSED - NB_EXPERTS), f32)], axis=1).astype(f32)     # (1, 80)

    # Constant selection/reduction matrices (built once, host-side).
    e80_np = np.zeros((NB_EXPERTS, FUSED), np.float32)
    r_np = np.zeros((FUSED, EXPERT_HIDDEN), np.float32)
    for e in range(NB_EXPERTS):
        s = GAIT_HIDDEN + e * EXPERT_HIDDEN
        e80_np[e, s:s + EXPERT_HIDDEN] = 1.0
        r_np[s:s + EXPERT_HIDDEN, :] = np.eye(EXPERT_HIDDEN, dtype=np.float32)

    a_pack = jnp.concatenate([wcat, bcat, gb2_pad, jnp.asarray(e80_np)], axis=0)  # (38, 80)

    g2_pad = jnp.concatenate(
        [gw2, jnp.zeros((FUSED - GAIT_HIDDEN, NB_EXPERTS), f32)], axis=0).astype(f32)  # (80, 4)
    b_pack = jnp.concatenate([jnp.asarray(r_np), g2_pad], axis=1)                 # (80, 20)

    return a_pack, b_pack


def moe_forward(x, params, *, block_b=BLOCK_B):
    a_pack, b_pack = pack_params(params)

    batched = x.ndim == 2
    if not batched:
        x = x[None, :]
    batch = x.shape[0]
    x = x.astype(jnp.float32)

    # Pick a batch tile: at least 8 sublanes, at most `block_b` rows; pad batch to a multiple.
    bb = min(block_b, max(8, ((batch + 7) // 8) * 8))
    padded = ((batch + bb - 1) // bb) * bb
    if padded != batch:
        x = jnp.pad(x, ((0, padded - batch), (0, 0)))
    grid = (padded // bb,)

    out = pl.pallas_call(
        moe_kernel,
        out_shape=jax.ShapeDtypeStruct((padded, EXPERT_HIDDEN), jnp.float32),
        grid_spec=pltpu.PrefetchScalarGridSpec(
            num_scalar_prefetch=0,
            grid=grid,
            in_specs=[
                pl.BlockSpec((bb, NB_INPUTS), lambda i: (i, 0)),
                pl.BlockSpec((A_ROWS, FUSED), lambda i: (0, 0)),
                pl.BlockSpec((FUSED, B_COLS), lambda i: (0, 0)),
            ],
            out_specs=pl.BlockSpec((bb, EXPERT_HIDDEN), lambda i: (i, 0)),
        ),
        compiler_params=pltpu.CompilerParams(dimension_semantics=("parallel",)),
    )(x, a_pack, b_pack)

    out = out[:batch]
    if not batched:
        out = out[0]
    return out


def init_params(key):
    """Deterministic init mimicking torch.nn.Linear's U(-1/sqrt(fan_in), 1/sqrt(fan_in))."""
    ks = jax.random.split(key, 3)

    def linear(k, fan_in, fan_out, lead=()):
        bound = 1.0 / float(np.sqrt(fan_in))
        kw, kb = jax.random.split(k)
        w = jax.random.uniform(kw, lead + (fan_in, fan_out), jnp.float32, -bound, bound)
        b = jax.random.uniform(kb, lead + (1, fan_out), jnp.float32, -bound, bound)
        return w, b

    gw1, gb1 = linear(ks[0], NB_INPUTS, GAIT_HIDDEN)
    gw2, gb2 = linear(ks[1], GAIT_HIDDEN, NB_EXPERTS)
    ew1, eb1 = linear(ks[2], NB_INPUTS, EXPERT_HIDDEN, lead=(NB_EXPERTS,))
    return gw1, gb1, gw2, gb2, ew1, eb1


def moe_reference(x, params):
    """Pure-JAX reference of the same forward semantics."""
    gw1, gb1, gw2, gb2, ew1, eb1 = params
    h = jnp.maximum(x @ gw1 + gb1, 0.0)
    probs = jax.nn.softmax(h @ gw2 + gb2, axis=-1)                       # (B, E)
    preds = jnp.maximum(jnp.einsum("bi,eio->ebo", x, ew1) + eb1, 0.0)    # (E, B, O)
    return jnp.einsum("be,ebo->bo", probs, preds)                        # (B, O)


if __name__ == "__main__":
    key = jax.random.PRNGKey(0)
    pkey, xkey = jax.random.split(key)
    params = init_params(pkey)
    x = jax.random.normal(xkey, (BATCH, NB_INPUTS), jnp.float32)

    out = moe_forward(x, params)
    jax.block_until_ready(out)

    ref = moe_reference(x, params)
    assert out.shape == (BATCH, EXPERT_HIDDEN)
    # Tolerance loosened vs. 1e-5 because the softmax denominator uses the approximate
    # EUP reciprocal (pl.reciprocal(..., approx=True)).
    np.testing.assert_allclose(np.asarray(out), np.asarray(ref), rtol=5e-3, atol=5e-3)
    print("KERNEL_OK")
</pallas_src>

<mosaic_0001>
module attributes {stable_mosaic.version = 11 : i64} {
  func.func @moe_kernel(%arg0: i32, %arg1: memref<8x32xf32, #tpu.memory_space<vmem>>, %arg2: memref<38x80xf32, #tpu.memory_space<vmem>>, %arg3: memref<80x20xf32, #tpu.memory_space<vmem>>, %arg4: memref<8x16xf32, #tpu.memory_space<vmem>>) attributes {dimension_semantics = [#tpu.dimension_semantics<parallel>], iteration_bounds = array<i64: 1>, scalar_prefetch = 0 : i64, scratch_operands = 0 : i64, tpu.core_type = #tpu.core_type<tc>, window_params = [{transform_indices = @transform_0, window_bounds = array<i64: 8, 32>}, {pipeline_mode = #tpu.pipeline_mode<synchronous>, transform_indices = @transform_1, window_bounds = array<i64: 38, 80>}, {pipeline_mode = #tpu.pipeline_mode<synchronous>, transform_indices = @transform_2, window_bounds = array<i64: 80, 20>}, {transform_indices = @transform_3, window_bounds = array<i64: 8, 16>}]} {
    %c0 = arith.constant 0 : index
    %c0_0 = arith.constant 0 : index
    %0 = vector.load %arg1[%c0, %c0_0] : memref<8x32xf32, #tpu.memory_space<vmem>>, vector<8x32xf32>
    %c0_1 = arith.constant 0 : index
    %c0_2 = arith.constant 0 : index
    %1 = vector.load %arg2[%c0_1, %c0_2] : memref<38x80xf32, #tpu.memory_space<vmem>>, vector<32x80xf32>
    %c32 = arith.constant 32 : index
    %c0_3 = arith.constant 0 : index
    %2 = vector.load %arg2[%c32, %c0_3] : memref<38x80xf32, #tpu.memory_space<vmem>>, vector<1x80xf32>
    %c33 = arith.constant 33 : index
    %c0_4 = arith.constant 0 : index
    %3 = vector.load %arg2[%c33, %c0_4] : memref<38x80xf32, #tpu.memory_space<vmem>>, vector<1x4xf32>
    %c34 = arith.constant 34 : index
    %c0_5 = arith.constant 0 : index
    %4 = vector.load %arg2[%c34, %c0_5] : memref<38x80xf32, #tpu.memory_space<vmem>>, vector<4x80xf32>
    %c0_6 = arith.constant 0 : index
    %c0_7 = arith.constant 0 : index
    %5 = vector.load %arg3[%c0_6, %c0_7] : memref<80x20xf32, #tpu.memory_space<vmem>>, vector<80x16xf32>
    %c0_8 = arith.constant 0 : index
    %c16 = arith.constant 16 : index
    %6 = vector.load %arg3[%c0_8, %c16] : memref<80x20xf32, #tpu.memory_space<vmem>>, vector<80x4xf32>
    %cst = arith.constant dense<0.000000e+00> : vector<8x80xf32>
    %7 = tpu.matmul %0, %1, %cst {dimension_numbers = #tpu.dot_dimension_numbers<[1], [0], [0], [1], [0, 0, 1, 1], [], []>} : vector<8x32xf32>, vector<32x80xf32>, vector<8x80xf32> -> vector<8x80xf32>
    %8 = vector.broadcast %2 : vector<1x80xf32> to vector<8x80xf32>
    %9 = arith.addf %7, %8 : vector<8x80xf32>
    %cst_9 = arith.constant 0.000000e+00 : f32
    %10 = vector.broadcast %cst_9 : f32 to vector<8x80xf32>
    %11 = arith.maximumf %9, %10 : vector<8x80xf32>
    %cst_10 = arith.constant dense<0.000000e+00> : vector<8x4xf32>
    %12 = tpu.matmul %11, %6, %cst_10 {dimension_numbers = #tpu.dot_dimension_numbers<[1], [0], [0], [1], [0, 0, 1, 1], [], []>} : vector<8x80xf32>, vector<80x4xf32>, vector<8x4xf32> -> vector<8x4xf32>
    %13 = vector.broadcast %3 : vector<1x4xf32> to vector<8x4xf32>
    %14 = arith.addf %12, %13 : vector<8x4xf32>
    %cst_11 = arith.constant dense<0xFF800000> : vector<8xf32>
    %15 = vector.multi_reduction <maximumf>, %14, %cst_11 [1] : vector<8x4xf32> to vector<8xf32>
    %16 = vector.shape_cast %15 : vector<8xf32> to vector<8x1xf32>
    %17 = vector.broadcast %16 : vector<8x1xf32> to vector<8x4xf32>
    %18 = arith.subf %14, %17 : vector<8x4xf32>
    %19 = math.exp %18 : vector<8x4xf32>
    %cst_12 = arith.constant dense<0.000000e+00> : vector<8xf32>
    %20 = vector.multi_reduction <add>, %19, %cst_12 [1] : vector<8x4xf32> to vector<8xf32>
    %21 = vector.shape_cast %20 : vector<8xf32> to vector<8x1xf32>
    %22 = tpu.reciprocal %21 {approx = true} : vector<8x1xf32> -> vector<8x1xf32>
    %23 = vector.broadcast %22 : vector<8x1xf32> to vector<8x4xf32>
    %24 = arith.mulf %19, %23 : vector<8x4xf32>
    %cst_13 = arith.constant dense<0.000000e+00> : vector<8x80xf32>
    %25 = tpu.matmul %24, %4, %cst_13 {dimension_numbers = #tpu.dot_dimension_numbers<[1], [0], [0], [1], [0, 0, 1, 1], [], []>} : vector<8x4xf32>, vector<4x80xf32>, vector<8x80xf32> -> vector<8x80xf32>
    %26 = arith.mulf %11, %25 : vector<8x80xf32>
    %cst_14 = arith.constant dense<0.000000e+00> : vector<8x16xf32>
    %27 = tpu.matmul %26, %5, %cst_14 {dimension_numbers = #tpu.dot_dimension_numbers<[1], [0], [0], [1], [0, 0, 1, 1], [], []>} : vector<8x80xf32>, vector<80x16xf32>, vector<8x16xf32> -> vector<8x16xf32>
    %c0_15 = arith.constant 0 : index
    %c0_16 = arith.constant 0 : index
    %28 = vector.load %arg4[%c0_15, %c0_16] : memref<8x16xf32, #tpu.memory_space<vmem>>, vector<8x16xf32>
    tpu.vector_store %arg4[%c0_15, %c0_16], %27 {strides = array<i32>} : memref<8x16xf32, #tpu.memory_space<vmem>>, vector<8x16xf32>,
    return
  }
  func.func @transform_0(%arg0: i32) -> (i32, i32) {
    %c0_i32 = arith.constant 0 : i32
    %c0_i32_0 = arith.constant 0 : i32
    return %arg0, %c0_i32 : i32, i32
  }
  func.func @transform_1(%arg0: i32) -> (i32, i32) {
    %c0_i32 = arith.constant 0 : i32
    %c0_i32_0 = arith.constant 0 : i32
    %c0_i32_1 = arith.constant 0 : i32
    return %c0_i32, %c0_i32_0 : i32, i32
  }
  func.func @transform_2(%arg0: i32) -> (i32, i32) {
    %c0_i32 = arith.constant 0 : i32
    %c0_i32_0 = arith.constant 0 : i32
    %c0_i32_1 = arith.constant 0 : i32
    return %c0_i32, %c0_i32_0 : i32, i32
  }
  func.func @transform_3(%arg0: i32) -> (i32, i32) {
    %c0_i32 = arith.constant 0 : i32
    %c0_i32_0 = arith.constant 0 : i32
    return %arg0, %c0_i32 : i32, i32
  }
}

</mosaic_0001>

<llo_original>
// kernel: tpu_custom_call.1
$region0: #{tpu_custom_call.1}
  #allocation0 [shape = 'u32[]', space=smem, size = 0x4, offset = 0x4, fixed_abs, tag = 'smem constant byte address 0x4 - core index']
  #allocation1 [shape = 'u32[144,128]{1,0:T(1,128)}', space=vmem, size = 0x12000, scoped, tag = 'internal scratch']
  %s0 = inlined_call_operand.vmem [shape: f32[8,32], index: 0, kind: input, shape index: {}]
  %s1 = inlined_call_operand.vmem [shape: f32[38,80], index: 1, kind: input, shape index: {}]
  %s2 = inlined_call_operand.vmem [shape: f32[80,20], index: 2, kind: input, shape index: {}]
  %s3 = inlined_call_operand.hbm [shape: f32[8,16], index: 3, kind: output, shape index: {}]
  %s4 = sld [smem:[#allocation0]]
  $region22: #{tpu_custom_call.1} parent=0
    _
  %s6 = ssub.s32 1, %s4
  %s7 = scalar_select 0, %s6, %s4
  $region1: #{tpu_custom_call.1} parent=0
    #allocation2 [shape = 'u8[4096]{0}', space=vmem, size = 0x1000, scoped, tag = 'output window, operand 0, single buffered']
    #allocation3 [shape = 's32[1]{0}', space=sflag, size = 0x4, scoped, tag = 'scoped memory for tpu_custom_call.1']
    %8 = vsyncpa [#allocation3], 0
    // Predicated region
    $region2: #{tpu_custom_call.1} parent=1 // pred_check
      _
    $region3: #{tpu_custom_call.1} parent=1 // pred_check_branch
      %10 = sbr.rel (0) target = $region5
    $region4: #{tpu_custom_call.1} parent=1 // pred_region
      _
    $region5: #{tpu_custom_call.1} parent=1 // pred_fallthru
      _
    // Predicated region
    $region6: #{tpu_custom_call.1} parent=1 // pred_check
      _
    $region7: #{tpu_custom_call.1} parent=1 // pred_check_branch
      %12 = sbr.rel (0) target = $region9
    $region8: #{tpu_custom_call.1} parent=1 // pred_region
      _
    $region9: #{tpu_custom_call.1} parent=1 // pred_fallthru
      _
    // Predicated region
    $region10: #{tpu_custom_call.1} parent=1 // pred_check
      _
    $region11: #{tpu_custom_call.1} parent=1 // pred_check_branch
      %14 = sbr.rel (0) target = $region13
    $region12: #{tpu_custom_call.1} parent=1 // pred_region
      _
    $region13: #{tpu_custom_call.1} parent=1 // pred_fallthru
      _
    %v15 = vld [vmem:[%s0] sm:$0xff]
    %v16 = vld [vmem:[%s1] sm:$0xff]
    %v17 = vld [vmem:[%s1 + $0x8] sm:$0xff]
    %v18 = vld [vmem:[%s1 + $0x10] sm:$0xff]
    %v19 = vld [vmem:[%s1 + $0x18] sm:$0xff]
    %v20 = vld [vmem:[%s1 + $0x20] sm:$0x1]
    %v21 = vld [vmem:[%s1 + $0x21] sm:$0x1]
    %v22 = vld [vmem:[%s1 + $0x22] sm:$0xf]
    %v23 = vld [vmem:[%s2] sm:$0xff]
    %v24 = vld [vmem:[%s2 + $0x8] sm:$0xff]
    %v25 = vld [vmem:[%s2 + $0x10] sm:$0xff]
    %v26 = vld [vmem:[%s2 + $0x18] sm:$0xff]
    %v27 = vld [vmem:[%s2 + $0x20] sm:$0xff]
    %v28 = vld [vmem:[%s2 + $0x28] sm:$0xff]
    %v29 = vld [vmem:[%s2 + $0x30] sm:$0xff]
    %v30 = vld [vmem:[%s2 + $0x38] sm:$0xff]
    %v31 = vld [vmem:[%s2 + $0x40] sm:$0xff]
    %v32 = vld [vmem:[%s2 + $0x48] sm:$0xff]
    %v33 = vlaneseq
    %v34 = vshrl.u32 %v33, 7
    %v35 = vsub.s32 0, %v34
    %v36 = vrot.slane %v20, %v35
    %vm37 = vcmask 261120
    %v39 = vsel %vm37, %v15, 0
    %41 = vmatprep.subr.mxu0 0.0
    %42 = vmatpush1.msra.mxu0 0.0
    %43 = vmatprep.subr.mxu0 0.0
    %44 = vmatpush1.msra.mxu0 0.0
    %45 = vmatprep.subr.mxu0 0.0
    %46 = vmatpush1.msra.mxu0 0.0
    %47 = vmatprep.subr.mxu0 0.0
    %48 = vmatpush1.msra.mxu0 0.0
    %49 = vmatprep.subr.mxu0 0.0
    %50 = vmatpush1.msra.mxu0 0.0
    %51 = vmatprep.subr.mxu0 0.0
    %52 = vmatpush1.msra.mxu0 0.0
    %53 = vmatprep.subr.mxu0 0.0
    %54 = vmatpush1.msra.mxu0 0.0
    %55 = vmatprep.subr.mxu0 0.0
    %56 = vmatpush1.msra.mxu0 0.0
    %57 = vmatprep.subr.mxu0 0.0
    %58 = vmatpush1.msra.mxu0 0.0
    %59 = vmatprep.subr.mxu0 0.0
    %60 = vmatpush1.msra.mxu0 0.0
    %61 = vmatprep.subr.mxu0 0.0
    %62 = vmatpush1.msra.mxu0 0.0
    %63 = vmatprep.subr.mxu0 0.0
    %64 = vmatpush1.msra.mxu0 0.0
    %65 = vmatprep.subr.mxu0 0.0
    %66 = vmatpush1.msra.mxu0 %v19
    %67 = vmatprep.subr.mxu0 0.0
    %68 = vmatpush1.msra.mxu0 %v18
    %69 = vmatprep.subr.mxu0 0.0
    %70 = vmatpush1.msra.mxu0 %v17
    %71 = vmatprep.subr.mxu0 0.0
    %72 = vmatpush1.msra.mxu0 %v16
    %73 = vmatprep.subr.mxu0 0.0
    %74 = vmatpush2.msra.mxu0 0.0
    %75 = vmatprep.subr.mxu0 0.0
    %76 = vmatpush2.msra.mxu0 0.0
    %77 = vmatprep.subr.mxu0 0.0
    %78 = vmatpush2.msra.mxu0 0.0
    %79 = vmatprep.subr.mxu0 0.0
    %80 = vmatpush2.msra.mxu0 0.0
    %81 = vmatprep.subr.mxu0 0.0
    %82 = vmatpush2.msra.mxu0 0.0
    %83 = vmatprep.subr.mxu0 0.0
    %84 = vmatpush2.msra.mxu0 0.0
    %85 = vmatprep.subr.mxu0 0.0
    %86 = vmatpush2.msra.mxu0 0.0
    %87 = vmatprep.subr.mxu0 0.0
    %88 = vmatpush2.msra.mxu0 0.0
    %89 = vmatprep.subr.mxu0 0.0
    %90 = vmatpush2.msra.mxu0 0.0
    %91 = vmatprep.subr.mxu0 0.0
    %92 = vmatpush2.msra.mxu0 0.0
    %93 = vmatprep.subr.mxu0 0.0
    %94 = vmatpush2.msra.mxu0 0.0
    %95 = vmatprep.subr.mxu0 0.0
    %96 = vmatpush2.msra.mxu0 0.0
    %97 = vmatprep.subr.mxu0 0.0
    %98 = vmatpush2.msra.mxu0 0.0
    %99 = vmatprep.subr.mxu0 0.0
    %100 = vmatpush2.msra.mxu0 0.0
    %101 = vmatprep.subr.mxu0 0.0
    %102 = vmatpush2.msra.mxu0 0.0
    %103 = vmatprep.subr.mxu0 0.0
    %104 = vmatpush2.msra.mxu0 0.0
    %105 = vmatprep.mubr.f32.mxu0 0.0
    %106 = vmatmul.mubr.f32.gmra.mxu0 %v39
    %v107 = vpop.f32.mrf.mxu0
    %v108 = vadd.f32 %v36, %v107
    %v109 = vpop.f32.mrf.mxu0
    %110 = vdwg.mxu0
    %v111 = vmax.f32 %v108, 0.0
    %v112 = vlaneseq
    %v113 = vshrl.u32 %v112, 7
    %v114 = vsub.s32 0, %v113
    %v115 = vrot.slane %v21, %v114
    %126 = vrot.lane.b32.xlu0 %v23, 112
    %v127 = vpop.permute.xlu0 %126
    %128 = vrot.lane.b32.xlu0 %v24, 112
    %v129 = vpop.permute.xlu0 %128
    %130 = vrot.lane.b32.xlu0 %v25, 112
    %v131 = vpop.permute.xlu0 %130
    %132 = vrot.lane.b32.xlu0 %v26, 112
    %v133 = vpop.permute.xlu0 %132
    %134 = vrot.lane.b32.xlu0 %v27, 112
    %v135 = vpop.permute.xlu0 %134
    %136 = vrot.lane.b32.xlu0 %v28, 112
    %v137 = vpop.permute.xlu0 %136
    %138 = vrot.lane.b32.xlu0 %v29, 112
    %v139 = vpop.permute.xlu0 %138
    %140 = vrot.lane.b32.xlu0 %v30, 112
    %v141 = vpop.permute.xlu0 %140
    %142 = vrot.lane.b32.xlu0 %v31, 112
    %v143 = vpop.permute.xlu0 %142
    %144 = vrot.lane.b32.xlu0 %v32, 112
    %v145 = vpop.permute.xlu0 %144
    %vm156 = vcmask 654336
    %v158 = vsel %vm156, %v111, 0
    %160 = vmatprep.subr.mxu0 0.0
    %161 = vmatpush1.msra.mxu0 0.0
    %162 = vmatprep.subr.mxu0 0.0
    %163 = vmatpush1.msra.mxu0 0.0
    %164 = vmatprep.subr.mxu0 0.0
    %165 = vmatpush1.msra.mxu0 0.0
    %166 = vmatprep.subr.mxu0 0.0
    %167 = vmatpush1.msra.mxu0 0.0
    %168 = vmatprep.subr.mxu0 0.0
    %169 = vmatpush1.msra.mxu0 0.0
    %170 = vmatprep.subr.mxu0 0.0
    %171 = vmatpush1.msra.mxu0 0.0
    %172 = vmatprep.subr.mxu0 0.0
    %173 = vmatpush1.msra.mxu0 %v145
    %174 = vmatprep.subr.mxu0 0.0
    %175 = vmatpush1.msra.mxu0 %v143
    %176 = vmatprep.subr.mxu0 0.0
    %177 = vmatpush1.msra.mxu0 %v141
    %178 = vmatprep.subr.mxu0 0.0
    %179 = vmatpush1.msra.mxu0 %v139
    %180 = vmatprep.subr.mxu0 0.0
    %181 = vmatpush1.msra.mxu0 %v137
    %182 = vmatprep.subr.mxu0 0.0
    %183 = vmatpush1.msra.mxu0 %v135
    %184 = vmatprep.subr.mxu0 0.0
    %185 = vmatpush1.msra.mxu0 %v133
    %186 = vmatprep.subr.mxu0 0.0
    %187 = vmatpush1.msra.mxu0 %v131
    %188 = vmatprep.subr.mxu0 0.0
    %189 = vmatpush1.msra.mxu0 %v129
    %190 = vmatprep.subr.mxu0 0.0
    %191 = vmatpush1.msra.mxu0 %v127
    %192 = vmatprep.subr.mxu0 0.0
    %193 = vmatpush2.msra.mxu0 0.0
    %194 = vmatprep.subr.mxu0 0.0
    %195 = vmatpush2.msra.mxu0 0.0
    %196 = vmatprep.subr.mxu0 0.0
    %197 = vmatpush2.msra.mxu0 0.0
    %198 = vmatprep.subr.mxu0 0.0
    %199 = vmatpush2.msra.mxu0 0.0
    %200 = vmatprep.subr.mxu0 0.0
    %201 = vmatpush2.msra.mxu0 0.0
    %202 = vmatprep.subr.mxu0 0.0
    %203 = vmatpush2.msra.mxu0 0.0
    %204 = vmatprep.subr.mxu0 0.0
    %205 = vmatpush2.msra.mxu0 0.0
    %206 = vmatprep.subr.mxu0 0.0
    %207 = vmatpush2.msra.mxu0 0.0
    %208 = vmatprep.subr.mxu0 0.0
    %209 = vmatpush2.msra.mxu0 0.0
    %210 = vmatprep.subr.mxu0 0.0
    %211 = vmatpush2.msra.mxu0 0.0
    %212 = vmatprep.subr.mxu0 0.0
    %213 = vmatpush2.msra.mxu0 0.0
    %214 = vmatprep.subr.mxu0 0.0
    %215 = vmatpush2.msra.mxu0 0.0
    %216 = vmatprep.subr.mxu0 0.0
    %217 = vmatpush2.msra.mxu0 0.0
    %218 = vmatprep.subr.mxu0 0.0
    %219 = vmatpush2.msra.mxu0 0.0
    %220 = vmatprep.subr.mxu0 0.0
    %221 = vmatpush2.msra.mxu0 0.0
    %222 = vmatprep.subr.mxu0 0.0
    %223 = vmatpush2.msra.mxu0 0.0
    %224 = vmatprep.mubr.f32.mxu0 0.0
    %225 = vmatmul.mubr.f32.gmra.mxu0 %v158
    %v226 = vpop.f32.mrf.mxu0
    %v227 = vadd.f32 %v115, %v226
    %v228 = vpop.f32.mrf.mxu0
    %229 = vdwg.mxu0
    %vm230 = vcmask 31744
    %v231 = vsel %vm230, %v227, -inf
    %232 = vmax.xlane.f32.xlu0 %v231
    %v233 = vpop.xlane.xlu0 %232
    %v234 = vsub.f32 %v227, %v233
    %v235 = vmul.f32 %v234, 1.442695
    %v236 = vpow.pop %v235
    %v237 = vsel %vm230, %v236, 0.0
    %238 = vadd.xlane.f32.xlu0 %v237
    %v239 = vpop.xlane.xlu0 %238
    %v240 = vrcp.pop %v239
    %v241 = vmul.f32 %v236, %v240
    %v243 = vsel %vm230, %v241, 0
    %vm245 = vcmask 1043456
    %v247 = vsel %vm245, %v22, 0
    %249 = vmatprep.subr.mxu0 0.0
    %250 = vmatpush1.msra.mxu0 0.0
    %251 = vmatprep.subr.mxu0 0.0
    %252 = vmatpush1.msra.mxu0 0.0
    %253 = vmatprep.subr.mxu0 0.0
    %254 = vmatpush1.msra.mxu0 0.0
    %255 = vmatprep.subr.mxu0 0.0
    %256 = vmatpush1.msra.mxu0 0.0
    %257 = vmatprep.subr.mxu0 0.0
    %258 = vmatpush1.msra.mxu0 0.0
    %259 = vmatprep.subr.mxu0 0.0
    %260 = vmatpush1.msra.mxu0 0.0
    %261 = vmatprep.subr.mxu0 0.0
    %262 = vmatpush1.msra.mxu0 0.0
    %263 = vmatprep.subr.mxu0 0.0
    %264 = vmatpush1.msra.mxu0 0.0
    %265 = vmatprep.subr.mxu0 0.0
    %266 = vmatpush1.msra.mxu0 0.0
    %267 = vmatprep.subr.mxu0 0.0
    %268 = vmatpush1.msra.mxu0 0.0
    %269 = vmatprep.subr.mxu0 0.0
    %270 = vmatpush1.msra.mxu0 0.0
    %271 = vmatprep.subr.mxu0 0.0
    %272 = vmatpush1.msra.mxu0 0.0
    %273 = vmatprep.subr.mxu0 0.0
    %274 = vmatpush1.msra.mxu0 0.0
    %275 = vmatprep.subr.mxu0 0.0
    %276 = vmatpush1.msra.mxu0 0.0
    %277 = vmatprep.subr.mxu0 0.0
    %278 = vmatpush1.msra.mxu0 0.0
    %279 = vmatprep.subr.mxu0 0.0
    %280 = vmatpush1.msra.mxu0 %v247
    %281 = vmatprep.subr.mxu0 0.0
    %282 = vmatpush2.msra.mxu0 0.0
    %283 = vmatprep.subr.mxu0 0.0
    %284 = vmatpush2.msra.mxu0 0.0
    %285 = vmatprep.subr.mxu0 0.0
    %286 = vmatpush2.msra.mxu0 0.0
    %287 = vmatprep.subr.mxu0 0.0
    %288 = vmatpush2.msra.mxu0 0.0
    %289 = vmatprep.subr.mxu0 0.0
    %290 = vmatpush2.msra.mxu0 0.0
    %291 = vmatprep.subr.mxu0 0.0
    %292 = vmatpush2.msra.mxu0 0.0
    %293 = vmatprep.subr.mxu0 0.0
    %294 = vmatpush2.msra.mxu0 0.0
    %295 = vmatprep.subr.mxu0 0.0
    %296 = vmatpush2.msra.mxu0 0.0
    %297 = vmatprep.subr.mxu0 0.0
    %298 = vmatpush2.msra.mxu0 0.0
    %299 = vmatprep.subr.mxu0 0.0
    %300 = vmatpush2.msra.mxu0 0.0
    %301 = vmatprep.subr.mxu0 0.0
    %302 = vmatpush2.msra.mxu0 0.0
    %303 = vmatprep.subr.mxu0 0.0
    %304 = vmatpush2.msra.mxu0 0.0
    %305 = vmatprep.subr.mxu0 0.0
    %306 = vmatpush2.msra.mxu0 0.0
    %307 = vmatprep.subr.mxu0 0.0
    %308 = vmatpush2.msra.mxu0 0.0
    %309 = vmatprep.subr.mxu0 0.0
    %310 = vmatpush2.msra.mxu0 0.0
    %311 = vmatprep.subr.mxu0 0.0
    %312 = vmatpush2.msra.mxu0 0.0
    %313 = vmatprep.mubr.f32.mxu0 0.0
    %314 = vmatmul.mubr.f32.gmra.mxu0 %v243
    %v315 = vpop.f32.mrf.mxu0
    %v316 = vadd.f32 0.0, %v315
    %v317 = vpop.f32.mrf.mxu0
    %318 = vdwg.mxu0
    %v319 = vmul.f32 %v111, %v316
    %v321 = vsel %vm156, %v319, 0
    %323 = vmatprep.subr.mxu0 0.0
    %324 = vmatpush1.msra.mxu0 0.0
    %325 = vmatprep.subr.mxu0 0.0
    %326 = vmatpush1.msra.mxu0 0.0
    %327 = vmatprep.subr.mxu0 0.0
    %328 = vmatpush1.msra.mxu0 0.0
    %329 = vmatprep.subr.mxu0 0.0
    %330 = vmatpush1.msra.mxu0 0.0
    %331 = vmatprep.subr.mxu0 0.0
    %332 = vmatpush1.msra.mxu0 0.0
    %333 = vmatprep.subr.mxu0 0.0
    %334 = vmatpush1.msra.mxu0 0.0
    %335 = vmatprep.subr.mxu0 0.0
    %336 = vmatpush1.msra.mxu0 %v32
    %337 = vmatprep.subr.mxu0 0.0
    %338 = vmatpush1.msra.mxu0 %v31
    %339 = vmatprep.subr.mxu0 0.0
    %340 = vmatpush1.msra.mxu0 %v30
    %341 = vmatprep.subr.mxu0 0.0
    %342 = vmatpush1.msra.mxu0 %v29
    %343 = vmatprep.subr.mxu0 0.0
    %344 = vmatpush1.msra.mxu0 %v28
    %345 = vmatprep.subr.mxu0 0.0
    %346 = vmatpush1.msra.mxu0 %v27
    %347 = vmatprep.subr.mxu0 0.0
    %348 = vmatpush1.msra.mxu0 %v26
    %349 = vmatprep.subr.mxu0 0.0
    %350 = vmatpush1.msra.mxu0 %v25
    %351 = vmatprep.subr.mxu0 0.0
    %352 = vmatpush1.msra.mxu0 %v24
    %353 = vmatprep.subr.mxu0 0.0
    %354 = vmatpush1.msra.mxu0 %v23
    %355 = vmatprep.subr.mxu0 0.0
    %356 = vmatpush2.msra.mxu0 0.0
    %357 = vmatprep.subr.mxu0 0.0
    %358 = vmatpush2.msra.mxu0 0.0
    %359 = vmatprep.subr.mxu0 0.0
    %360 = vmatpush2.msra.mxu0 0.0
    %361 = vmatprep.subr.mxu0 0.0
    %362 = vmatpush2.msra.mxu0 0.0
    %363 = vmatprep.subr.mxu0 0.0
    %364 = vmatpush2.msra.mxu0 0.0
    %365 = vmatprep.subr.mxu0 0.0
    %366 = vmatpush2.msra.mxu0 0.0
    %367 = vmatprep.subr.mxu0 0.0
    %368 = vmatpush2.msra.mxu0 0.0
    %369 = vmatprep.subr.mxu0 0.0
    %370 = vmatpush2.msra.mxu0 0.0
    %371 = vmatprep.subr.mxu0 0.0
    %372 = vmatpush2.msra.mxu0 0.0
    %373 = vmatprep.subr.mxu0 0.0
    %374 = vmatpush2.msra.mxu0 0.0
    %375 = vmatprep.subr.mxu0 0.0
    %376 = vmatpush2.msra.mxu0 0.0
    %377 = vmatprep.subr.mxu0 0.0
    %378 = vmatpush2.msra.mxu0 0.0
    %379 = vmatprep.subr.mxu0 0.0
    %380 = vmatpush2.msra.mxu0 0.0
    %381 = vmatprep.subr.mxu0 0.0
    %382 = vmatpush2.msra.mxu0 0.0
    %383 = vmatprep.subr.mxu0 0.0
    %384 = vmatpush2.msra.mxu0 0.0
    %385 = vmatprep.subr.mxu0 0.0
    %386 = vmatpush2.msra.mxu0 0.0
    %387 = vmatprep.mubr.f32.mxu0 0.0
    %388 = vmatmul.mubr.f32.gmra.mxu0 %v321
    %v389 = vpop.f32.mrf.mxu0
    %v390 = vadd.f32 0.0, %v389
    %v391 = vpop.f32.mrf.mxu0
    %392 = vdwg.mxu0
    %vm393 = vcmask 130048
    %394 = vst.msk [vmem:[#allocation2] sm:$0xff] %vm393, %v390
    // Predicated region
    $region14: #{tpu_custom_call.1} parent=1 // pred_check
      _
    $region15: #{tpu_custom_call.1} parent=1 // pred_check_branch
      %396 = sbr.rel (0) target = $region17
    $region16: #{tpu_custom_call.1} parent=1 // pred_region
      %s398 = ssub.s32 128, 128
      %399 = vsyncadd [#allocation3], %s398
      %s401 = sshll.u32 [#allocation2], 4
      %s402 = int_to_ptr.vmem [resolvable:$true] %s401
      %404 = dma.vmem_to_hbm [thread:$0]  %s402, 128, %s3, [#allocation3]
    $region17: #{tpu_custom_call.1} parent=1 // pred_fallthru
      _
    // Predicated region
    $region18: #{tpu_custom_call.1} parent=1 // pred_check
      _
    $region19: #{tpu_custom_call.1} parent=1 // pred_check_branch
      %406 = sbr.rel (0) target = $region21
    $region20: #{tpu_custom_call.1} parent=1 // pred_region
      %407 = dma.done [#allocation3], 128
    $region21: #{tpu_custom_call.1} parent=1 // pred_fallthru
      _
    %408 = vsyncpa [#allocation3], 1

</llo_original>
